<compile_context>
chip_gen: v6e
topology: v6e:2x2x1
jax: 0.10.0
libtpu: 0.0.40
codegen_flags: <defaults>
</compile_context>

<pallas_src>
import jax
import jax.numpy as jnp
from jax.experimental import pallas as pl
from jax.experimental.pallas import tpu as pltpu

VOCAB_SIZE = 16
VECTOR_DIM = 8
HIDDEN = 6          # nn.RNN(vector_dim, 6, bias=False)
NUM_CLASSES = 4     # nn.Linear(6, 4)
SEQ_LEN = 4         # AvgPool1d(4) + squeeze() implies sequence length == 4

TILE_B = 8          # batch rows per grid step (== f32 sublanes per vreg)
SLAB_W = 128        # lane-dense width for the packed param slab and the output

# Packed-slab row layout (all unused entries are zero):
EMB_OFF = 0                        # rows [ 0, 16): emb_table @ W_ih^T   (V, H)
WHH_OFF = EMB_OFF + VOCAB_SIZE     # rows [16, 22): W_hh^T               (H, H)
WC_OFF = 24                        # rows [24, 30): W_cls^T (8-aligned)  (H, C)
BC_OFF = 30                        # row   30     : b_cls                (C,)
SLAB_ROWS = 32


def rnn_classify_kernel(tok_ref, slab_ref, out_ref, xw_ref):
    """One batch tile: fused embedding gather + RNN + avg-pool + classifier.

    tok_ref : SMEM (B_pad, T) int32    scalar-prefetched token ids
    slab_ref: VMEM (32, 128)  f32      packed parameters (see *_OFF layout)
    out_ref : VMEM (TILE_B, 128) f32   lane-dense logits (cols [0, C) valid)
    xw_ref  : VMEM (TILE_B, 128) f32   scratch for gathered projected embeddings
    """
    base = pl.program_id(0) * TILE_B

    whh = slab_ref[pl.ds(WHH_OFF, HIDDEN), :]     # (H, 128)  == W_hh^T (padded)
    wc = slab_ref[pl.ds(WC_OFF, HIDDEN), :]       # (H, 128)  == W_cls^T (padded)
    bc = slab_ref[pl.ds(BC_OFF, 1), :]            # (1, 128)  == b_cls (padded)

    h = jnp.zeros((TILE_B, SLAB_W), jnp.float32)
    acc = jnp.zeros((TILE_B, SLAB_W), jnp.float32)

    for t in range(SEQ_LEN):                      # T = 4, static unroll
        # Embedding gather (already folded with W_ih^T): scalar-indexed row
        # copies driven by SMEM token ids -- no XLA gather, no MXU, no reshape.
        for b in range(TILE_B):
            tok = tok_ref[base + b, t]
            xw_ref[pl.ds(b, 1), :] = slab_ref[pl.ds(EMB_OFF + tok, 1), :]
        pre = xw_ref[...]
        # Recurrent term on the VPU: sum_k h[:, k] * W_hh^T[k, :] (broadcast FMA).
        for k in range(HIDDEN):
            pre = pre + h[:, k:k + 1] * whh[k:k + 1, :]
        h = jnp.tanh(pre)                         # EUP
        acc = acc + h

    # x.transpose(1,2) -> AvgPool1d(T) -> squeeze() == mean over the T steps.
    pooled = acc * (1.0 / SEQ_LEN)

    # Linear(6, 4) on the VPU; padded lanes of wc/bc are zero.
    logits = jnp.broadcast_to(bc, (TILE_B, SLAB_W))
    for k in range(HIDDEN):
        logits = logits + pooled[:, k:k + 1] * wc[k:k + 1, :]
    out_ref[...] = logits                         # full (8, 128) unmasked store


def pack_params(emb_table, w_ih, w_hh, w_cls, b_cls):
    """One-time packing (done at init, not per forward call)."""
    emb_proj = emb_table.astype(jnp.float32) @ w_ih.T.astype(jnp.float32)  # (V, H)
    slab = jnp.zeros((SLAB_ROWS, SLAB_W), jnp.float32)
    slab = slab.at[EMB_OFF:EMB_OFF + VOCAB_SIZE, :HIDDEN].set(emb_proj)
    slab = slab.at[WHH_OFF:WHH_OFF + HIDDEN, :HIDDEN].set(w_hh.T)
    slab = slab.at[WC_OFF:WC_OFF + HIDDEN, :NUM_CLASSES].set(w_cls.T)
    slab = slab.at[BC_OFF, :NUM_CLASSES].set(b_cls)
    return slab


def torch_model_forward(token_ids, slab):
    """Equivalent of TorchModel.forward(x) (y_t=None path -> returns logits)."""
    B, T = token_ids.shape
    assert T == SEQ_LEN
    n_tiles = pl.cdiv(B, TILE_B)
    b_pad = n_tiles * TILE_B
    toks = jnp.zeros((b_pad, T), jnp.int32).at[:B, :].set(
        token_ids.astype(jnp.int32))

    out = pl.pallas_call(
        rnn_classify_kernel,
        out_shape=jax.ShapeDtypeStruct((b_pad, SLAB_W), jnp.float32),
        grid_spec=pltpu.PrefetchScalarGridSpec(
            num_scalar_prefetch=1,                 # token ids -> SMEM
            grid=(n_tiles,),
            in_specs=[pl.BlockSpec((SLAB_ROWS, SLAB_W), lambda i, tok: (0, 0))],
            out_specs=pl.BlockSpec((TILE_B, SLAB_W), lambda i, tok: (i, 0)),
            scratch_shapes=[pltpu.VMEM((TILE_B, SLAB_W), jnp.float32)],
        ),
        compiler_params=pltpu.CompilerParams(
            dimension_semantics=("parallel",)),
    )(toks, slab)
    return out[:B, :NUM_CLASSES]


def _reference_forward(token_ids, emb_table, w_ih, w_hh, w_cls, b_cls):
    """Pure-JAX reference mirroring the PyTorch forward pass."""
    x = jnp.take(emb_table, token_ids, axis=0).astype(jnp.float32)  # (B, T, D)
    B, T, _ = x.shape
    h = jnp.zeros((B, HIDDEN), jnp.float32)
    hs = []
    for t in range(T):
        h = jnp.tanh(x[:, t, :] @ w_ih.T + h @ w_hh.T)
        hs.append(h)
    pooled = jnp.mean(jnp.stack(hs, axis=1), axis=1)  # AvgPool1d(4) + squeeze
    return pooled @ w_cls.T + b_cls


if __name__ == "__main__":
    key = jax.random.PRNGKey(0)
    k_emb, k_ih, k_hh, k_w, k_b, k_tok, k_tok2 = jax.random.split(key, 7)

    # Deterministic synthetic parameters (shapes follow the module's __init__).
    emb_table = jax.random.normal(k_emb, (VOCAB_SIZE, VECTOR_DIM), jnp.float32)
    bound = 1.0 / jnp.sqrt(jnp.float32(HIDDEN))
    w_ih = jax.random.uniform(k_ih, (HIDDEN, VECTOR_DIM), jnp.float32,
                              -bound, bound)     # RNN weight_ih_l0
    w_hh = jax.random.uniform(k_hh, (HIDDEN, HIDDEN), jnp.float32,
                              -bound, bound)     # RNN weight_hh_l0
    w_cls = jax.random.uniform(k_w, (NUM_CLASSES, HIDDEN), jnp.float32,
                               -bound, bound)    # classify.weight
    b_cls = jax.random.uniform(k_b, (NUM_CLASSES,), jnp.float32,
                               -bound, bound)    # classify.bias

    # One-time parameter packing (folds Embedding through W_ih, builds the slab).
    slab = jax.block_until_ready(pack_params(emb_table, w_ih, w_hh, w_cls, b_cls))

    # Small demo batch, matching the module's implied shapes.
    token_ids = jax.random.randint(k_tok, (2, SEQ_LEN), 0, VOCAB_SIZE)
    y_p = jax.block_until_ready(torch_model_forward(token_ids, slab))
    y_ref = _reference_forward(token_ids, emb_table, w_ih, w_hh, w_cls, b_cls)
    assert y_p.shape == (2, NUM_CLASSES)
    assert jnp.allclose(y_p, y_ref, rtol=1e-4, atol=1e-5)

    # Larger batch exercises the multi-tile "parallel" grid path.
    token_ids_big = jax.random.randint(k_tok2, (16, SEQ_LEN), 0, VOCAB_SIZE)
    y_big = jax.block_until_ready(torch_model_forward(token_ids_big, slab))
    y_big_ref = _reference_forward(token_ids_big, emb_table, w_ih, w_hh,
                                   w_cls, b_cls)
    assert y_big.shape == (16, NUM_CLASSES)
    assert jnp.allclose(y_big, y_big_ref, rtol=1e-4, atol=1e-5)

    # TODO(synk): the optional cross_entropy loss branch (y_t is not None) is
    # training-only glue and is not implemented in the kernel.
    print("KERNEL_OK")
</pallas_src>

<mosaic_0001>
module attributes {stable_mosaic.version = 11 : i64} {
  func.func @rnn_classify_kernel(%arg0: i32, %arg1: memref<8x4xi32, #tpu.memory_space<smem>>, %arg2: memref<32x128xf32, #tpu.memory_space<vmem>>, %arg3: memref<8x128xf32, #tpu.memory_space<vmem>>, %arg4: memref<8x128xf32, #tpu.memory_space<vmem>>) attributes {dimension_semantics = [#tpu.dimension_semantics<parallel>], iteration_bounds = array<i64: 1>, scalar_prefetch = 1 : i64, scratch_operands = 1 : i64, tpu.core_type = #tpu.core_type<tc>, window_params = [{pipeline_mode = #tpu.pipeline_mode<synchronous>, transform_indices = @transform_0, window_bounds = array<i64: 32, 128>}, {transform_indices = @transform_1, window_bounds = array<i64: 8, 128>}]} {
    %c8_i32 = arith.constant 8 : i32
    %0 = arith.muli %arg0, %c8_i32 : i32
    %c16 = arith.constant 16 : index
    %c0 = arith.constant 0 : index
    %1 = vector.load %arg2[%c16, %c0] : memref<32x128xf32, #tpu.memory_space<vmem>>, vector<6x128xf32>
    %c24 = arith.constant 24 : index
    %c0_0 = arith.constant 0 : index
    %2 = vector.load %arg2[%c24, %c0_0] : memref<32x128xf32, #tpu.memory_space<vmem>>, vector<6x128xf32>
    %c30 = arith.constant 30 : index
    %c0_1 = arith.constant 0 : index
    %3 = vector.load %arg2[%c30, %c0_1] : memref<32x128xf32, #tpu.memory_space<vmem>>, vector<1x128xf32>
    %cst = arith.constant 0.000000e+00 : f32
    %4 = vector.broadcast %cst : f32 to vector<8x128xf32>
    %cst_2 = arith.constant 0.000000e+00 : f32
    %5 = vector.broadcast %cst_2 : f32 to vector<8x128xf32>
    %c0_i32 = arith.constant 0 : i32
    %6 = arith.addi %0, %c0_i32 : i32
    %7 = arith.index_cast %6 : i32 to index
    %c0_3 = arith.constant 0 : index
    %8 = memref.load %arg1[%7, %c0_3] : memref<8x4xi32, #tpu.memory_space<smem>>
    %c0_i32_4 = arith.constant 0 : i32
    %9 = arith.addi %c0_i32_4, %8 : i32
    %10 = arith.index_cast %9 : i32 to index
    %c0_5 = arith.constant 0 : index
    %11 = vector.load %arg2[%10, %c0_5] : memref<32x128xf32, #tpu.memory_space<vmem>>, vector<1x128xf32>
    %c0_6 = arith.constant 0 : index
    %c0_7 = arith.constant 0 : index
    %12 = vector.load %arg4[%c0_6, %c0_7] : memref<8x128xf32, #tpu.memory_space<vmem>>, vector<1x128xf32>
    tpu.vector_store %arg4[%c0_6, %c0_7], %11 {strides = array<i32>} : memref<8x128xf32, #tpu.memory_space<vmem>>, vector<1x128xf32>,
    %c1_i32 = arith.constant 1 : i32
    %13 = arith.addi %0, %c1_i32 : i32
    %14 = arith.index_cast %13 : i32 to index
    %c0_8 = arith.constant 0 : index
    %15 = memref.load %arg1[%14, %c0_8] : memref<8x4xi32, #tpu.memory_space<smem>>
    %c0_i32_9 = arith.constant 0 : i32
    %16 = arith.addi %c0_i32_9, %15 : i32
    %17 = arith.index_cast %16 : i32 to index
    %c0_10 = arith.constant 0 : index
    %18 = vector.load %arg2[%17, %c0_10] : memref<32x128xf32, #tpu.memory_space<vmem>>, vector<1x128xf32>
    %c1 = arith.constant 1 : index
    %c0_11 = arith.constant 0 : index
    %19 = vector.load %arg4[%c1, %c0_11] : memref<8x128xf32, #tpu.memory_space<vmem>>, vector<1x128xf32>
    tpu.vector_store %arg4[%c1, %c0_11], %18 {strides = array<i32>} : memref<8x128xf32, #tpu.memory_space<vmem>>, vector<1x128xf32>,
    %c2_i32 = arith.constant 2 : i32
    %20 = arith.addi %0, %c2_i32 : i32
    %21 = arith.index_cast %20 : i32 to index
    %c0_12 = arith.constant 0 : index
    %22 = memref.load %arg1[%21, %c0_12] : memref<8x4xi32, #tpu.memory_space<smem>>
    %c0_i32_13 = arith.constant 0 : i32
    %23 = arith.addi %c0_i32_13, %22 : i32
    %24 = arith.index_cast %23 : i32 to index
    %c0_14 = arith.constant 0 : index
    %25 = vector.load %arg2[%24, %c0_14] : memref<32x128xf32, #tpu.memory_space<vmem>>, vector<1x128xf32>
    %c2 = arith.constant 2 : index
    %c0_15 = arith.constant 0 : index
    %26 = vector.load %arg4[%c2, %c0_15] : memref<8x128xf32, #tpu.memory_space<vmem>>, vector<1x128xf32>
    tpu.vector_store %arg4[%c2, %c0_15], %25 {strides = array<i32>} : memref<8x128xf32, #tpu.memory_space<vmem>>, vector<1x128xf32>,
    %c3_i32 = arith.constant 3 : i32
    %27 = arith.addi %0, %c3_i32 : i32
    %28 = arith.index_cast %27 : i32 to index
    %c0_16 = arith.constant 0 : index
    %29 = memref.load %arg1[%28, %c0_16] : memref<8x4xi32, #tpu.memory_space<smem>>
    %c0_i32_17 = arith.constant 0 : i32
    %30 = arith.addi %c0_i32_17, %29 : i32
    %31 = arith.index_cast %30 : i32 to index
    %c0_18 = arith.constant 0 : index
    %32 = vector.load %arg2[%31, %c0_18] : memref<32x128xf32, #tpu.memory_space<vmem>>, vector<1x128xf32>
    %c3 = arith.constant 3 : index
    %c0_19 = arith.constant 0 : index
    %33 = vector.load %arg4[%c3, %c0_19] : memref<8x128xf32, #tpu.memory_space<vmem>>, vector<1x128xf32>
    tpu.vector_store %arg4[%c3, %c0_19], %32 {strides = array<i32>} : memref<8x128xf32, #tpu.memory_space<vmem>>, vector<1x128xf32>,
    %c4_i32 = arith.constant 4 : i32
    %34 = arith.addi %0, %c4_i32 : i32
    %35 = arith.index_cast %34 : i32 to index
    %c0_20 = arith.constant 0 : index
    %36 = memref.load %arg1[%35, %c0_20] : memref<8x4xi32, #tpu.memory_space<smem>>
    %c0_i32_21 = arith.constant 0 : i32
    %37 = arith.addi %c0_i32_21, %36 : i32
    %38 = arith.index_cast %37 : i32 to index
    %c0_22 = arith.constant 0 : index
    %39 = vector.load %arg2[%38, %c0_22] : memref<32x128xf32, #tpu.memory_space<vmem>>, vector<1x128xf32>
    %c4 = arith.constant 4 : index
    %c0_23 = arith.constant 0 : index
    %40 = vector.load %arg4[%c4, %c0_23] : memref<8x128xf32, #tpu.memory_space<vmem>>, vector<1x128xf32>
    tpu.vector_store %arg4[%c4, %c0_23], %39 {strides = array<i32>} : memref<8x128xf32, #tpu.memory_space<vmem>>, vector<1x128xf32>,
    %c5_i32 = arith.constant 5 : i32
    %41 = arith.addi %0, %c5_i32 : i32
    %42 = arith.index_cast %41 : i32 to index
    %c0_24 = arith.constant 0 : index
    %43 = memref.load %arg1[%42, %c0_24] : memref<8x4xi32, #tpu.memory_space<smem>>
    %c0_i32_25 = arith.constant 0 : i32
    %44 = arith.addi %c0_i32_25, %43 : i32
    %45 = arith.index_cast %44 : i32 to index
    %c0_26 = arith.constant 0 : index
    %46 = vector.load %arg2[%45, %c0_26] : memref<32x128xf32, #tpu.memory_space<vmem>>, vector<1x128xf32>
    %c5 = arith.constant 5 : index
    %c0_27 = arith.constant 0 : index
    %47 = vector.load %arg4[%c5, %c0_27] : memref<8x128xf32, #tpu.memory_space<vmem>>, vector<1x128xf32>
    tpu.vector_store %arg4[%c5, %c0_27], %46 {strides = array<i32>} : memref<8x128xf32, #tpu.memory_space<vmem>>, vector<1x128xf32>,
    %c6_i32 = arith.constant 6 : i32
    %48 = arith.addi %0, %c6_i32 : i32
    %49 = arith.index_cast %48 : i32 to index
    %c0_28 = arith.constant 0 : index
    %50 = memref.load %arg1[%49, %c0_28] : memref<8x4xi32, #tpu.memory_space<smem>>
    %c0_i32_29 = arith.constant 0 : i32
    %51 = arith.addi %c0_i32_29, %50 : i32
    %52 = arith.index_cast %51 : i32 to index
    %c0_30 = arith.constant 0 : index
    %53 = vector.load %arg2[%52, %c0_30] : memref<32x128xf32, #tpu.memory_space<vmem>>, vector<1x128xf32>
    %c6 = arith.constant 6 : index
    %c0_31 = arith.constant 0 : index
    %54 = vector.load %arg4[%c6, %c0_31] : memref<8x128xf32, #tpu.memory_space<vmem>>, vector<1x128xf32>
    tpu.vector_store %arg4[%c6, %c0_31], %53 {strides = array<i32>} : memref<8x128xf32, #tpu.memory_space<vmem>>, vector<1x128xf32>,
    %c7_i32 = arith.constant 7 : i32
    %55 = arith.addi %0, %c7_i32 : i32
    %56 = arith.index_cast %55 : i32 to index
    %c0_32 = arith.constant 0 : index
    %57 = memref.load %arg1[%56, %c0_32] : memref<8x4xi32, #tpu.memory_space<smem>>
    %c0_i32_33 = arith.constant 0 : i32
    %58 = arith.addi %c0_i32_33, %57 : i32
    %59 = arith.index_cast %58 : i32 to index
    %c0_34 = arith.constant 0 : index
    %60 = vector.load %arg2[%59, %c0_34] : memref<32x128xf32, #tpu.memory_space<vmem>>, vector<1x128xf32>
    %c7 = arith.constant 7 : index
    %c0_35 = arith.constant 0 : index
    %61 = vector.load %arg4[%c7, %c0_35] : memref<8x128xf32, #tpu.memory_space<vmem>>, vector<1x128xf32>
    tpu.vector_store %arg4[%c7, %c0_35], %60 {strides = array<i32>} : memref<8x128xf32, #tpu.memory_space<vmem>>, vector<1x128xf32>,
    %c0_36 = arith.constant 0 : index
    %c0_37 = arith.constant 0 : index
    %62 = vector.load %arg4[%c0_36, %c0_37] : memref<8x128xf32, #tpu.memory_space<vmem>>, vector<8x128xf32>
    %63 = vector.extract_strided_slice %4 {offsets = [0, 0], sizes = [8, 1], strides = [1, 1]} : vector<8x128xf32> to vector<8x1xf32>
    %64 = vector.extract_strided_slice %1 {offsets = [0, 0], sizes = [1, 128], strides = [1, 1]} : vector<6x128xf32> to vector<1x128xf32>
    %65 = vector.broadcast %63 : vector<8x1xf32> to vector<8x128xf32>
    %66 = vector.broadcast %64 : vector<1x128xf32> to vector<8x128xf32>
    %67 = arith.mulf %65, %66 : vector<8x128xf32>
    %68 = arith.addf %62, %67 : vector<8x128xf32>
    %69 = vector.extract_strided_slice %4 {offsets = [0, 1], sizes = [8, 1], strides = [1, 1]} : vector<8x128xf32> to vector<8x1xf32>
    %70 = vector.extract_strided_slice %1 {offsets = [1, 0], sizes = [1, 128], strides = [1, 1]} : vector<6x128xf32> to vector<1x128xf32>
    %71 = vector.broadcast %69 : vector<8x1xf32> to vector<8x128xf32>
    %72 = vector.broadcast %70 : vector<1x128xf32> to vector<8x128xf32>
    %73 = arith.mulf %71, %72 : vector<8x128xf32>
    %74 = arith.addf %68, %73 : vector<8x128xf32>
    %75 = vector.extract_strided_slice %4 {offsets = [0, 2], sizes = [8, 1], strides = [1, 1]} : vector<8x128xf32> to vector<8x1xf32>
    %76 = vector.extract_strided_slice %1 {offsets = [2, 0], sizes = [1, 128], strides = [1, 1]} : vector<6x128xf32> to vector<1x128xf32>
    %77 = vector.broadcast %75 : vector<8x1xf32> to vector<8x128xf32>
    %78 = vector.broadcast %76 : vector<1x128xf32> to vector<8x128xf32>
    %79 = arith.mulf %77, %78 : vector<8x128xf32>
    %80 = arith.addf %74, %79 : vector<8x128xf32>
    %81 = vector.extract_strided_slice %4 {offsets = [0, 3], sizes = [8, 1], strides = [1, 1]} : vector<8x128xf32> to vector<8x1xf32>
    %82 = vector.extract_strided_slice %1 {offsets = [3, 0], sizes = [1, 128], strides = [1, 1]} : vector<6x128xf32> to vector<1x128xf32>
    %83 = vector.broadcast %81 : vector<8x1xf32> to vector<8x128xf32>
    %84 = vector.broadcast %82 : vector<1x128xf32> to vector<8x128xf32>
    %85 = arith.mulf %83, %84 : vector<8x128xf32>
    %86 = arith.addf %80, %85 : vector<8x128xf32>
    %87 = vector.extract_strided_slice %4 {offsets = [0, 4], sizes = [8, 1], strides = [1, 1]} : vector<8x128xf32> to vector<8x1xf32>
    %88 = vector.extract_strided_slice %1 {offsets = [4, 0], sizes = [1, 128], strides = [1, 1]} : vector<6x128xf32> to vector<1x128xf32>
    %89 = vector.broadcast %87 : vector<8x1xf32> to vector<8x128xf32>
    %90 = vector.broadcast %88 : vector<1x128xf32> to vector<8x128xf32>
    %91 = arith.mulf %89, %90 : vector<8x128xf32>
    %92 = arith.addf %86, %91 : vector<8x128xf32>
    %93 = vector.extract_strided_slice %4 {offsets = [0, 5], sizes = [8, 1], strides = [1, 1]} : vector<8x128xf32> to vector<8x1xf32>
    %94 = vector.extract_strided_slice %1 {offsets = [5, 0], sizes = [1, 128], strides = [1, 1]} : vector<6x128xf32> to vector<1x128xf32>
    %95 = vector.broadcast %93 : vector<8x1xf32> to vector<8x128xf32>
    %96 = vector.broadcast %94 : vector<1x128xf32> to vector<8x128xf32>
    %97 = arith.mulf %95, %96 : vector<8x128xf32>
    %98 = arith.addf %92, %97 : vector<8x128xf32>
    %99 = math.tanh %98 : vector<8x128xf32>
    %100 = arith.addf %5, %99 : vector<8x128xf32>
    %c0_i32_38 = arith.constant 0 : i32
    %101 = arith.addi %0, %c0_i32_38 : i32
    %102 = arith.index_cast %101 : i32 to index
    %c1_39 = arith.constant 1 : index
    %103 = memref.load %arg1[%102, %c1_39] : memref<8x4xi32, #tpu.memory_space<smem>>
    %c0_i32_40 = arith.constant 0 : i32
    %104 = arith.addi %c0_i32_40, %103 : i32
    %105 = arith.index_cast %104 : i32 to index
    %c0_41 = arith.constant 0 : index
    %106 = vector.load %arg2[%105, %c0_41] : memref<32x128xf32, #tpu.memory_space<vmem>>, vector<1x128xf32>
    %c0_42 = arith.constant 0 : index
    %c0_43 = arith.constant 0 : index
    %107 = vector.load %arg4[%c0_42, %c0_43] : memref<8x128xf32, #tpu.memory_space<vmem>>, vector<1x128xf32>
    tpu.vector_store %arg4[%c0_42, %c0_43], %106 {strides = array<i32>} : memref<8x128xf32, #tpu.memory_space<vmem>>, vector<1x128xf32>,
    %c1_i32_44 = arith.constant 1 : i32
    %108 = arith.addi %0, %c1_i32_44 : i32
    %109 = arith.index_cast %108 : i32 to index
    %c1_45 = arith.constant 1 : index
    %110 = memref.load %arg1[%109, %c1_45] : memref<8x4xi32, #tpu.memory_space<smem>>
    %c0_i32_46 = arith.constant 0 : i32
    %111 = arith.addi %c0_i32_46, %110 : i32
    %112 = arith.index_cast %111 : i32 to index
    %c0_47 = arith.constant 0 : index
    %113 = vector.load %arg2[%112, %c0_47] : memref<32x128xf32, #tpu.memory_space<vmem>>, vector<1x128xf32>
    %c1_48 = arith.constant 1 : index
    %c0_49 = arith.constant 0 : index
    %114 = vector.load %arg4[%c1_48, %c0_49] : memref<8x128xf32, #tpu.memory_space<vmem>>, vector<1x128xf32>
    tpu.vector_store %arg4[%c1_48, %c0_49], %113 {strides = array<i32>} : memref<8x128xf32, #tpu.memory_space<vmem>>, vector<1x128xf32>,
    %c2_i32_50 = arith.constant 2 : i32
    %115 = arith.addi %0, %c2_i32_50 : i32
    %116 = arith.index_cast %115 : i32 to index
    %c1_51 = arith.constant 1 : index
    %117 = memref.load %arg1[%116, %c1_51] : memref<8x4xi32, #tpu.memory_space<smem>>
    %c0_i32_52 = arith.constant 0 : i32
    %118 = arith.addi %c0_i32_52, %117 : i32
    %119 = arith.index_cast %118 : i32 to index
    %c0_53 = arith.constant 0 : index
    %120 = vector.load %arg2[%119, %c0_53] : memref<32x128xf32, #tpu.memory_space<vmem>>, vector<1x128xf32>
    %c2_54 = arith.constant 2 : index
    %c0_55 = arith.constant 0 : index
    %121 = vector.load %arg4[%c2_54, %c0_55] : memref<8x128xf32, #tpu.memory_space<vmem>>, vector<1x128xf32>
    tpu.vector_store %arg4[%c2_54, %c0_55], %120 {strides = array<i32>} : memref<8x128xf32, #tpu.memory_space<vmem>>, vector<1x128xf32>,
    %c3_i32_56 = arith.constant 3 : i32
    %122 = arith.addi %0, %c3_i32_56 : i32
    %123 = arith.index_cast %122 : i32 to index
    %c1_57 = arith.constant 1 : index
    %124 = memref.load %arg1[%123, %c1_57] : memref<8x4xi32, #tpu.memory_space<smem>>
    %c0_i32_58 = arith.constant 0 : i32
    %125 = arith.addi %c0_i32_58, %124 : i32
    %126 = arith.index_cast %125 : i32 to index
    %c0_59 = arith.constant 0 : index
    %127 = vector.load %arg2[%126, %c0_59] : memref<32x128xf32, #tpu.memory_space<vmem>>, vector<1x128xf32>
    %c3_60 = arith.constant 3 : index
    %c0_61 = arith.constant 0 : index
    %128 = vector.load %arg4[%c3_60, %c0_61] : memref<8x128xf32, #tpu.memory_space<vmem>>, vector<1x128xf32>
    tpu.vector_store %arg4[%c3_60, %c0_61], %127 {strides = array<i32>} : memref<8x128xf32, #tpu.memory_space<vmem>>, vector<1x128xf32>,
    %c4_i32_62 = arith.constant 4 : i32
    %129 = arith.addi %0, %c4_i32_62 : i32
    %130 = arith.index_cast %129 : i32 to index
    %c1_63 = arith.constant 1 : index
    %131 = memref.load %arg1[%130, %c1_63] : memref<8x4xi32, #tpu.memory_space<smem>>
    %c0_i32_64 = arith.constant 0 : i32
    %132 = arith.addi %c0_i32_64, %131 : i32
    %133 = arith.index_cast %132 : i32 to index
    %c0_65 = arith.constant 0 : index
    %134 = vector.load %arg2[%133, %c0_65] : memref<32x128xf32, #tpu.memory_space<vmem>>, vector<1x128xf32>
    %c4_66 = arith.constant 4 : index
    %c0_67 = arith.constant 0 : index
    %135 = vector.load %arg4[%c4_66, %c0_67] : memref<8x128xf32, #tpu.memory_space<vmem>>, vector<1x128xf32>
    tpu.vector_store %arg4[%c4_66, %c0_67], %134 {strides = array<i32>} : memref<8x128xf32, #tpu.memory_space<vmem>>, vector<1x128xf32>,
    %c5_i32_68 = arith.constant 5 : i32
    %136 = arith.addi %0, %c5_i32_68 : i32
    %137 = arith.index_cast %136 : i32 to index
    %c1_69 = arith.constant 1 : index
    %138 = memref.load %arg1[%137, %c1_69] : memref<8x4xi32, #tpu.memory_space<smem>>
    %c0_i32_70 = arith.constant 0 : i32
    %139 = arith.addi %c0_i32_70, %138 : i32
    %140 = arith.index_cast %139 : i32 to index
    %c0_71 = arith.constant 0 : index
    %141 = vector.load %arg2[%140, %c0_71] : memref<32x128xf32, #tpu.memory_space<vmem>>, vector<1x128xf32>
    %c5_72 = arith.constant 5 : index
    %c0_73 = arith.constant 0 : index
    %142 = vector.load %arg4[%c5_72, %c0_73] : memref<8x128xf32, #tpu.memory_space<vmem>>, vector<1x128xf32>
    tpu.vector_store %arg4[%c5_72, %c0_73], %141 {strides = array<i32>} : memref<8x128xf32, #tpu.memory_space<vmem>>, vector<1x128xf32>,
    %c6_i32_74 = arith.constant 6 : i32
    %143 = arith.addi %0, %c6_i32_74 : i32
    %144 = arith.index_cast %143 : i32 to index
    %c1_75 = arith.constant 1 : index
    %145 = memref.load %arg1[%144, %c1_75] : memref<8x4xi32, #tpu.memory_space<smem>>
    %c0_i32_76 = arith.constant 0 : i32
    %146 = arith.addi %c0_i32_76, %145 : i32
    %147 = arith.index_cast %146 : i32 to index
    %c0_77 = arith.constant 0 : index
    %148 = vector.load %arg2[%147, %c0_77] : memref<32x128xf32, #tpu.memory_space<vmem>>, vector<1x128xf32>
    %c6_78 = arith.constant 6 : index
    %c0_79 = arith.constant 0 : index
    %149 = vector.load %arg4[%c6_78, %c0_79] : memref<8x128xf32, #tpu.memory_space<vmem>>, vector<1x128xf32>
    tpu.vector_store %arg4[%c6_78, %c0_79], %148 {strides = array<i32>} : memref<8x128xf32, #tpu.memory_space<vmem>>, vector<1x128xf32>,
    %c7_i32_80 = arith.constant 7 : i32
    %150 = arith.addi %0, %c7_i32_80 : i32
    %151 = arith.index_cast %150 : i32 to index
    %c1_81 = arith.constant 1 : index
    %152 = memref.load %arg1[%151, %c1_81] : memref<8x4xi32, #tpu.memory_space<smem>>
    %c0_i32_82 = arith.constant 0 : i32
    %153 = arith.addi %c0_i32_82, %152 : i32
    %154 = arith.index_cast %153 : i32 to index
    %c0_83 = arith.constant 0 : index
    %155 = vector.load %arg2[%154, %c0_83] : memref<32x128xf32, #tpu.memory_space<vmem>>, vector<1x128xf32>
    %c7_84 = arith.constant 7 : index
    %c0_85 = arith.constant 0 : index
    %156 = vector.load %arg4[%c7_84, %c0_85] : memref<8x128xf32, #tpu.memory_space<vmem>>, vector<1x128xf32>
    tpu.vector_store %arg4[%c7_84, %c0_85], %155 {strides = array<i32>} : memref<8x128xf32, #tpu.memory_space<vmem>>, vector<1x128xf32>,
    %c0_86 = arith.constant 0 : index
    %c0_87 = arith.constant 0 : index
    %157 = vector.load %arg4[%c0_86, %c0_87] : memref<8x128xf32, #tpu.memory_space<vmem>>, vector<8x128xf32>
    %158 = vector.extract_strided_slice %99 {offsets = [0, 0], sizes = [8, 1], strides = [1, 1]} : vector<8x128xf32> to vector<8x1xf32>
    %159 = vector.extract_strided_slice %1 {offsets = [0, 0], sizes = [1, 128], strides = [1, 1]} : vector<6x128xf32> to vector<1x128xf32>
    %160 = vector.broadcast %158 : vector<8x1xf32> to vector<8x128xf32>
    %161 = vector.broadcast %159 : vector<1x128xf32> to vector<8x128xf32>
    %162 = arith.mulf %160, %161 : vector<8x128xf32>
    %163 = arith.addf %157, %162 : vector<8x128xf32>
    %164 = vector.extract_strided_slice %99 {offsets = [0, 1], sizes = [8, 1], strides = [1, 1]} : vector<8x128xf32> to vector<8x1xf32>
    %165 = vector.extract_strided_slice %1 {offsets = [1, 0], sizes = [1, 128], strides = [1, 1]} : vector<6x128xf32> to vector<1x128xf32>
    %166 = vector.broadcast %164 : vector<8x1xf32> to vector<8x128xf32>
    %167 = vector.broadcast %165 : vector<1x128xf32> to vector<8x128xf32>
    %168 = arith.mulf %166, %167 : vector<8x128xf32>
    %169 = arith.addf %163, %168 : vector<8x128xf32>
    %170 = vector.extract_strided_slice %99 {offsets = [0, 2], sizes = [8, 1], strides = [1, 1]} : vector<8x128xf32> to vector<8x1xf32>
    %171 = vector.extract_strided_slice %1 {offsets = [2, 0], sizes = [1, 128], strides = [1, 1]} : vector<6x128xf32> to vector<1x128xf32>
    %172 = vector.broadcast %170 : vector<8x1xf32> to vector<8x128xf32>
    %173 = vector.broadcast %171 : vector<1x128xf32> to vector<8x128xf32>
    %174 = arith.mulf %172, %173 : vector<8x128xf32>
    %175 = arith.addf %169, %174 : vector<8x128xf32>
    %176 = vector.extract_strided_slice %99 {offsets = [0, 3], sizes = [8, 1], strides = [1, 1]} : vector<8x128xf32> to vector<8x1xf32>
    %177 = vector.extract_strided_slice %1 {offsets = [3, 0], sizes = [1, 128], strides = [1, 1]} : vector<6x128xf32> to vector<1x128xf32>
    %178 = vector.broadcast %176 : vector<8x1xf32> to vector<8x128xf32>
    %179 = vector.broadcast %177 : vector<1x128xf32> to vector<8x128xf32>
    %180 = arith.mulf %178, %179 : vector<8x128xf32>
    %181 = arith.addf %175, %180 : vector<8x128xf32>
    %182 = vector.extract_strided_slice %99 {offsets = [0, 4], sizes = [8, 1], strides = [1, 1]} : vector<8x128xf32> to vector<8x1xf32>
    %183 = vector.extract_strided_slice %1 {offsets = [4, 0], sizes = [1, 128], strides = [1, 1]} : vector<6x128xf32> to vector<1x128xf32>
    %184 = vector.broadcast %182 : vector<8x1xf32> to vector<8x128xf32>
    %185 = vector.broadcast %183 : vector<1x128xf32> to vector<8x128xf32>
    %186 = arith.mulf %184, %185 : vector<8x128xf32>
    %187 = arith.addf %181, %186 : vector<8x128xf32>
    %188 = vector.extract_strided_slice %99 {offsets = [0, 5], sizes = [8, 1], strides = [1, 1]} : vector<8x128xf32> to vector<8x1xf32>
    %189 = vector.extract_strided_slice %1 {offsets = [5, 0], sizes = [1, 128], strides = [1, 1]} : vector<6x128xf32> to vector<1x128xf32>
    %190 = vector.broadcast %188 : vector<8x1xf32> to vector<8x128xf32>
    %191 = vector.broadcast %189 : vector<1x128xf32> to vector<8x128xf32>
    %192 = arith.mulf %190, %191 : vector<8x128xf32>
    %193 = arith.addf %187, %192 : vector<8x128xf32>
    %194 = math.tanh %193 : vector<8x128xf32>
    %195 = arith.addf %100, %194 : vector<8x128xf32>
    %c0_i32_88 = arith.constant 0 : i32
    %196 = arith.addi %0, %c0_i32_88 : i32
    %197 = arith.index_cast %196 : i32 to index
    %c2_89 = arith.constant 2 : index
    %198 = memref.load %arg1[%197, %c2_89] : memref<8x4xi32, #tpu.memory_space<smem>>
    %c0_i32_90 = arith.constant 0 : i32
    %199 = arith.addi %c0_i32_90, %198 : i32
    %200 = arith.index_cast %199 : i32 to index
    %c0_91 = arith.constant 0 : index
    %201 = vector.load %arg2[%200, %c0_91] : memref<32x128xf32, #tpu.memory_space<vmem>>, vector<1x128xf32>
    %c0_92 = arith.constant 0 : index
    %c0_93 = arith.constant 0 : index
    %202 = vector.load %arg4[%c0_92, %c0_93] : memref<8x128xf32, #tpu.memory_space<vmem>>, vector<1x128xf32>
    tpu.vector_store %arg4[%c0_92, %c0_93], %201 {strides = array<i32>} : memref<8x128xf32, #tpu.memory_space<vmem>>, vector<1x128xf32>,
    %c1_i32_94 = arith.constant 1 : i32
    %203 = arith.addi %0, %c1_i32_94 : i32
    %204 = arith.index_cast %203 : i32 to index
    %c2_95 = arith.constant 2 : index
    %205 = memref.load %arg1[%204, %c2_95] : memref<8x4xi32, #tpu.memory_space<smem>>
    %c0_i32_96 = arith.constant 0 : i32
    %206 = arith.addi %c0_i32_96, %205 : i32
    %207 = arith.index_cast %206 : i32 to index
    %c0_97 = arith.constant 0 : index
    %208 = vector.load %arg2[%207, %c0_97] : memref<32x128xf32, #tpu.memory_space<vmem>>, vector<1x128xf32>
    %c1_98 = arith.constant 1 : index
    %c0_99 = arith.constant 0 : index
    %209 = vector.load %arg4[%c1_98, %c0_99] : memref<8x128xf32, #tpu.memory_space<vmem>>, vector<1x128xf32>
    tpu.vector_store %arg4[%c1_98, %c0_99], %208 {strides = array<i32>} : memref<8x128xf32, #tpu.memory_space<vmem>>, vector<1x128xf32>,
    %c2_i32_100 = arith.constant 2 : i32
    %210 = arith.addi %0, %c2_i32_100 : i32
    %211 = arith.index_cast %210 : i32 to index
    %c2_101 = arith.constant 2 : index
    %212 = memref.load %arg1[%211, %c2_101] : memref<8x4xi32, #tpu.memory_space<smem>>
    %c0_i32_102 = arith.constant 0 : i32
    %213 = arith.addi %c0_i32_102, %212 : i32
    %214 = arith.index_cast %213 : i32 to index
    %c0_103 = arith.constant 0 : index
    %215 = vector.load %arg2[%214, %c0_103] : memref<32x128xf32, #tpu.memory_space<vmem>>, vector<1x128xf32>
    %c2_104 = arith.constant 2 : index
    %c0_105 = arith.constant 0 : index
    %216 = vector.load %arg4[%c2_104, %c0_105] : memref<8x128xf32, #tpu.memory_space<vmem>>, vector<1x128xf32>
    tpu.vector_store %arg4[%c2_104, %c0_105], %215 {strides = array<i32>} : memref<8x128xf32, #tpu.memory_space<vmem>>, vector<1x128xf32>,
    %c3_i32_106 = arith.constant 3 : i32
    %217 = arith.addi %0, %c3_i32_106 : i32
    %218 = arith.index_cast %217 : i32 to index
    %c2_107 = arith.constant 2 : index
    %219 = memref.load %arg1[%218, %c2_107] : memref<8x4xi32, #tpu.memory_space<smem>>
    %c0_i32_108 = arith.constant 0 : i32
    %220 = arith.addi %c0_i32_108, %219 : i32
    %221 = arith.index_cast %220 : i32 to index
    %c0_109 = arith.constant 0 : index
    %222 = vector.load %arg2[%221, %c0_109] : memref<32x128xf32, #tpu.memory_space<vmem>>, vector<1x128xf32>
    %c3_110 = arith.constant 3 : index
    %c0_111 = arith.constant 0 : index
    %223 = vector.load %arg4[%c3_110, %c0_111] : memref<8x128xf32, #tpu.memory_space<vmem>>, vector<1x128xf32>
    tpu.vector_store %arg4[%c3_110, %c0_111], %222 {strides = array<i32>} : memref<8x128xf32, #tpu.memory_space<vmem>>, vector<1x128xf32>,
    %c4_i32_112 = arith.constant 4 : i32
    %224 = arith.addi %0, %c4_i32_112 : i32
    %225 = arith.index_cast %224 : i32 to index
    %c2_113 = arith.constant 2 : index
    %226 = memref.load %arg1[%225, %c2_113] : memref<8x4xi32, #tpu.memory_space<smem>>
    %c0_i32_114 = arith.constant 0 : i32
    %227 = arith.addi %c0_i32_114, %226 : i32
    %228 = arith.index_cast %227 : i32 to index
    %c0_115 = arith.constant 0 : index
    %229 = vector.load %arg2[%228, %c0_115] : memref<32x128xf32, #tpu.memory_space<vmem>>, vector<1x128xf32>
    %c4_116 = arith.constant 4 : index
    %c0_117 = arith.constant 0 : index
    %230 = vector.load %arg4[%c4_116, %c0_117] : memref<8x128xf32, #tpu.memory_space<vmem>>, vector<1x128xf32>
    tpu.vector_store %arg4[%c4_116, %c0_117], %229 {strides = array<i32>} : memref<8x128xf32, #tpu.memory_space<vmem>>, vector<1x128xf32>,
    %c5_i32_118 = arith.constant 5 : i32
    %231 = arith.addi %0, %c5_i32_118 : i32
    %232 = arith.index_cast %231 : i32 to index
    %c2_119 = arith.constant 2 : index
    %233 = memref.load %arg1[%232, %c2_119] : memref<8x4xi32, #tpu.memory_space<smem>>
    %c0_i32_120 = arith.constant 0 : i32
    %234 = arith.addi %c0_i32_120, %233 : i32
    %235 = arith.index_cast %234 : i32 to index
    %c0_121 = arith.constant 0 : index
    %236 = vector.load %arg2[%235, %c0_121] : memref<32x128xf32, #tpu.memory_space<vmem>>, vector<1x128xf32>
    %c5_122 = arith.constant 5 : index
    %c0_123 = arith.constant 0 : index
    %237 = vector.load %arg4[%c5_122, %c0_123] : memref<8x128xf32, #tpu.memory_space<vmem>>, vector<1x128xf32>
    tpu.vector_store %arg4[%c5_122, %c0_123], %236 {strides = array<i32>} : memref<8x128xf32, #tpu.memory_space<vmem>>, vector<1x128xf32>,
    %c6_i32_124 = arith.constant 6 : i32
    %238 = arith.addi %0, %c6_i32_124 : i32
    %239 = arith.index_cast %238 : i32 to index
    %c2_125 = arith.constant 2 : index
    %240 = memref.load %arg1[%239, %c2_125] : memref<8x4xi32, #tpu.memory_space<smem>>
    %c0_i32_126 = arith.constant 0 : i32
    %241 = arith.addi %c0_i32_126, %240 : i32
    %242 = arith.index_cast %241 : i32 to index
    %c0_127 = arith.constant 0 : index
    %243 = vector.load %arg2[%242, %c0_127] : memref<32x128xf32, #tpu.memory_space<vmem>>, vector<1x128xf32>
    %c6_128 = arith.constant 6 : index
    %c0_129 = arith.constant 0 : index
    %244 = vector.load %arg4[%c6_128, %c0_129] : memref<8x128xf32, #tpu.memory_space<vmem>>, vector<1x128xf32>
    tpu.vector_store %arg4[%c6_128, %c0_129], %243 {strides = array<i32>} : memref<8x128xf32, #tpu.memory_space<vmem>>, vector<1x128xf32>,
    %c7_i32_130 = arith.constant 7 : i32
    %245 = arith.addi %0, %c7_i32_130 : i32
    %246 = arith.index_cast %245 : i32 to index
    %c2_131 = arith.constant 2 : index
    %247 = memref.load %arg1[%246, %c2_131] : memref<8x4xi32, #tpu.memory_space<smem>>
    %c0_i32_132 = arith.constant 0 : i32
    %248 = arith.addi %c0_i32_132, %247 : i32
    %249 = arith.index_cast %248 : i32 to index
    %c0_133 = arith.constant 0 : index
    %250 = vector.load %arg2[%249, %c0_133] : memref<32x128xf32, #tpu.memory_space<vmem>>, vector<1x128xf32>
    %c7_134 = arith.constant 7 : index
    %c0_135 = arith.constant 0 : index
    %251 = vector.load %arg4[%c7_134, %c0_135] : memref<8x128xf32, #tpu.memory_space<vmem>>, vector<1x128xf32>
    tpu.vector_store %arg4[%c7_134, %c0_135], %250 {strides = array<i32>} : memref<8x128xf32, #tpu.memory_space<vmem>>, vector<1x128xf32>,
    %c0_136 = arith.constant 0 : index
    %c0_137 = arith.constant 0 : index
    %252 = vector.load %arg4[%c0_136, %c0_137] : memref<8x128xf32, #tpu.memory_space<vmem>>, vector<8x128xf32>
    %253 = vector.extract_strided_slice %194 {offsets = [0, 0], sizes = [8, 1], strides = [1, 1]} : vector<8x128xf32> to vector<8x1xf32>
    %254 = vector.extract_strided_slice %1 {offsets = [0, 0], sizes = [1, 128], strides = [1, 1]} : vector<6x128xf32> to vector<1x128xf32>
    %255 = vector.broadcast %253 : vector<8x1xf32> to vector<8x128xf32>
    %256 = vector.broadcast %254 : vector<1x128xf32> to vector<8x128xf32>
    %257 = arith.mulf %255, %256 : vector<8x128xf32>
    %258 = arith.addf %252, %257 : vector<8x128xf32>
    %259 = vector.extract_strided_slice %194 {offsets = [0, 1], sizes = [8, 1], strides = [1, 1]} : vector<8x128xf32> to vector<8x1xf32>
    %260 = vector.extract_strided_slice %1 {offsets = [1, 0], sizes = [1, 128], strides = [1, 1]} : vector<6x128xf32> to vector<1x128xf32>
    %261 = vector.broadcast %259 : vector<8x1xf32> to vector<8x128xf32>
    %262 = vector.broadcast %260 : vector<1x128xf32> to vector<8x128xf32>
    %263 = arith.mulf %261, %262 : vector<8x128xf32>
    %264 = arith.addf %258, %263 : vector<8x128xf32>
    %265 = vector.extract_strided_slice %194 {offsets = [0, 2], sizes = [8, 1], strides = [1, 1]} : vector<8x128xf32> to vector<8x1xf32>
    %266 = vector.extract_strided_slice %1 {offsets = [2, 0], sizes = [1, 128], strides = [1, 1]} : vector<6x128xf32> to vector<1x128xf32>
    %267 = vector.broadcast %265 : vector<8x1xf32> to vector<8x128xf32>
    %268 = vector.broadcast %266 : vector<1x128xf32> to vector<8x128xf32>
    %269 = arith.mulf %267, %268 : vector<8x128xf32>
    %270 = arith.addf %264, %269 : vector<8x128xf32>
    %271 = vector.extract_strided_slice %194 {offsets = [0, 3], sizes = [8, 1], strides = [1, 1]} : vector<8x128xf32> to vector<8x1xf32>
    %272 = vector.extract_strided_slice %1 {offsets = [3, 0], sizes = [1, 128], strides = [1, 1]} : vector<6x128xf32> to vector<1x128xf32>
    %273 = vector.broadcast %271 : vector<8x1xf32> to vector<8x128xf32>
    %274 = vector.broadcast %272 : vector<1x128xf32> to vector<8x128xf32>
    %275 = arith.mulf %273, %274 : vector<8x128xf32>
    %276 = arith.addf %270, %275 : vector<8x128xf32>
    %277 = vector.extract_strided_slice %194 {offsets = [0, 4], sizes = [8, 1], strides = [1, 1]} : vector<8x128xf32> to vector<8x1xf32>
    %278 = vector.extract_strided_slice %1 {offsets = [4, 0], sizes = [1, 128], strides = [1, 1]} : vector<6x128xf32> to vector<1x128xf32>
    %279 = vector.broadcast %277 : vector<8x1xf32> to vector<8x128xf32>
    %280 = vector.broadcast %278 : vector<1x128xf32> to vector<8x128xf32>
    %281 = arith.mulf %279, %280 : vector<8x128xf32>
    %282 = arith.addf %276, %281 : vector<8x128xf32>
    %283 = vector.extract_strided_slice %194 {offsets = [0, 5], sizes = [8, 1], strides = [1, 1]} : vector<8x128xf32> to vector<8x1xf32>
    %284 = vector.extract_strided_slice %1 {offsets = [5, 0], sizes = [1, 128], strides = [1, 1]} : vector<6x128xf32> to vector<1x128xf32>
    %285 = vector.broadcast %283 : vector<8x1xf32> to vector<8x128xf32>
    %286 = vector.broadcast %284 : vector<1x128xf32> to vector<8x128xf32>
    %287 = arith.mulf %285, %286 : vector<8x128xf32>
    %288 = arith.addf %282, %287 : vector<8x128xf32>
    %289 = math.tanh %288 : vector<8x128xf32>
    %290 = arith.addf %195, %289 : vector<8x128xf32>
    %c0_i32_138 = arith.constant 0 : i32
    %291 = arith.addi %0, %c0_i32_138 : i32
    %292 = arith.index_cast %291 : i32 to index
    %c3_139 = arith.constant 3 : index
    %293 = memref.load %arg1[%292, %c3_139] : memref<8x4xi32, #tpu.memory_space<smem>>
    %c0_i32_140 = arith.constant 0 : i32
    %294 = arith.addi %c0_i32_140, %293 : i32
    %295 = arith.index_cast %294 : i32 to index
    %c0_141 = arith.constant 0 : index
    %296 = vector.load %arg2[%295, %c0_141] : memref<32x128xf32, #tpu.memory_space<vmem>>, vector<1x128xf32>
    %c0_142 = arith.constant 0 : index
    %c0_143 = arith.constant 0 : index
    %297 = vector.load %arg4[%c0_142, %c0_143] : memref<8x128xf32, #tpu.memory_space<vmem>>, vector<1x128xf32>
    tpu.vector_store %arg4[%c0_142, %c0_143], %296 {strides = array<i32>} : memref<8x128xf32, #tpu.memory_space<vmem>>, vector<1x128xf32>,
    %c1_i32_144 = arith.constant 1 : i32
    %298 = arith.addi %0, %c1_i32_144 : i32
    %299 = arith.index_cast %298 : i32 to index
    %c3_145 = arith.constant 3 : index
    %300 = memref.load %arg1[%299, %c3_145] : memref<8x4xi32, #tpu.memory_space<smem>>
    %c0_i32_146 = arith.constant 0 : i32
    %301 = arith.addi %c0_i32_146, %300 : i32
    %302 = arith.index_cast %301 : i32 to index
    %c0_147 = arith.constant 0 : index
    %303 = vector.load %arg2[%302, %c0_147] : memref<32x128xf32, #tpu.memory_space<vmem>>, vector<1x128xf32>
    %c1_148 = arith.constant 1 : index
    %c0_149 = arith.constant 0 : index
    %304 = vector.load %arg4[%c1_148, %c0_149] : memref<8x128xf32, #tpu.memory_space<vmem>>, vector<1x128xf32>
    tpu.vector_store %arg4[%c1_148, %c0_149], %303 {strides = array<i32>} : memref<8x128xf32, #tpu.memory_space<vmem>>, vector<1x128xf32>,
    %c2_i32_150 = arith.constant 2 : i32
    %305 = arith.addi %0, %c2_i32_150 : i32
    %306 = arith.index_cast %305 : i32 to index
    %c3_151 = arith.constant 3 : index
    %307 = memref.load %arg1[%306, %c3_151] : memref<8x4xi32, #tpu.memory_space<smem>>
    %c0_i32_152 = arith.constant 0 : i32
    %308 = arith.addi %c0_i32_152, %307 : i32
    %309 = arith.index_cast %308 : i32 to index
    %c0_153 = arith.constant 0 : index
    %310 = vector.load %arg2[%309, %c0_153] : memref<32x128xf32, #tpu.memory_space<vmem>>, vector<1x128xf32>
    %c2_154 = arith.constant 2 : index
    %c0_155 = arith.constant 0 : index
    %311 = vector.load %arg4[%c2_154, %c0_155] : memref<8x128xf32, #tpu.memory_space<vmem>>, vector<1x128xf32>
    tpu.vector_store %arg4[%c2_154, %c0_155], %310 {strides = array<i32>} : memref<8x128xf32, #tpu.memory_space<vmem>>, vector<1x128xf32>,
    %c3_i32_156 = arith.constant 3 : i32
    %312 = arith.addi %0, %c3_i32_156 : i32
    %313 = arith.index_cast %312 : i32 to index
    %c3_157 = arith.constant 3 : index
    %314 = memref.load %arg1[%313, %c3_157] : memref<8x4xi32, #tpu.memory_space<smem>>
    %c0_i32_158 = arith.constant 0 : i32
    %315 = arith.addi %c0_i32_158, %314 : i32
    %316 = arith.index_cast %315 : i32 to index
    %c0_159 = arith.constant 0 : index
    %317 = vector.load %arg2[%316, %c0_159] : memref<32x128xf32, #tpu.memory_space<vmem>>, vector<1x128xf32>
    %c3_160 = arith.constant 3 : index
    %c0_161 = arith.constant 0 : index
    %318 = vector.load %arg4[%c3_160, %c0_161] : memref<8x128xf32, #tpu.memory_space<vmem>>, vector<1x128xf32>
    tpu.vector_store %arg4[%c3_160, %c0_161], %317 {strides = array<i32>} : memref<8x128xf32, #tpu.memory_space<vmem>>, vector<1x128xf32>,
    %c4_i32_162 = arith.constant 4 : i32
    %319 = arith.addi %0, %c4_i32_162 : i32
    %320 = arith.index_cast %319 : i32 to index
    %c3_163 = arith.constant 3 : index
    %321 = memref.load %arg1[%320, %c3_163] : memref<8x4xi32, #tpu.memory_space<smem>>
    %c0_i32_164 = arith.constant 0 : i32
    %322 = arith.addi %c0_i32_164, %321 : i32
    %323 = arith.index_cast %322 : i32 to index
    %c0_165 = arith.constant 0 : index
    %324 = vector.load %arg2[%323, %c0_165] : memref<32x128xf32, #tpu.memory_space<vmem>>, vector<1x128xf32>
    %c4_166 = arith.constant 4 : index
    %c0_167 = arith.constant 0 : index
    %325 = vector.load %arg4[%c4_166, %c0_167] : memref<8x128xf32, #tpu.memory_space<vmem>>, vector<1x128xf32>
    tpu.vector_store %arg4[%c4_166, %c0_167], %324 {strides = array<i32>} : memref<8x128xf32, #tpu.memory_space<vmem>>, vector<1x128xf32>,
    %c5_i32_168 = arith.constant 5 : i32
    %326 = arith.addi %0, %c5_i32_168 : i32
    %327 = arith.index_cast %326 : i32 to index
    %c3_169 = arith.constant 3 : index
    %328 = memref.load %arg1[%327, %c3_169] : memref<8x4xi32, #tpu.memory_space<smem>>
    %c0_i32_170 = arith.constant 0 : i32
    %329 = arith.addi %c0_i32_170, %328 : i32
    %330 = arith.index_cast %329 : i32 to index
    %c0_171 = arith.constant 0 : index
    %331 = vector.load %arg2[%330, %c0_171] : memref<32x128xf32, #tpu.memory_space<vmem>>, vector<1x128xf32>
    %c5_172 = arith.constant 5 : index
    %c0_173 = arith.constant 0 : index
    %332 = vector.load %arg4[%c5_172, %c0_173] : memref<8x128xf32, #tpu.memory_space<vmem>>, vector<1x128xf32>
    tpu.vector_store %arg4[%c5_172, %c0_173], %331 {strides = array<i32>} : memref<8x128xf32, #tpu.memory_space<vmem>>, vector<1x128xf32>,
    %c6_i32_174 = arith.constant 6 : i32
    %333 = arith.addi %0, %c6_i32_174 : i32
    %334 = arith.index_cast %333 : i32 to index
    %c3_175 = arith.constant 3 : index
    %335 = memref.load %arg1[%334, %c3_175] : memref<8x4xi32, #tpu.memory_space<smem>>
    %c0_i32_176 = arith.constant 0 : i32
    %336 = arith.addi %c0_i32_176, %335 : i32
    %337 = arith.index_cast %336 : i32 to index
    %c0_177 = arith.constant 0 : index
    %338 = vector.load %arg2[%337, %c0_177] : memref<32x128xf32, #tpu.memory_space<vmem>>, vector<1x128xf32>
    %c6_178 = arith.constant 6 : index
    %c0_179 = arith.constant 0 : index
    %339 = vector.load %arg4[%c6_178, %c0_179] : memref<8x128xf32, #tpu.memory_space<vmem>>, vector<1x128xf32>
    tpu.vector_store %arg4[%c6_178, %c0_179], %338 {strides = array<i32>} : memref<8x128xf32, #tpu.memory_space<vmem>>, vector<1x128xf32>,
    %c7_i32_180 = arith.constant 7 : i32
    %340 = arith.addi %0, %c7_i32_180 : i32
    %341 = arith.index_cast %340 : i32 to index
    %c3_181 = arith.constant 3 : index
    %342 = memref.load %arg1[%341, %c3_181] : memref<8x4xi32, #tpu.memory_space<smem>>
    %c0_i32_182 = arith.constant 0 : i32
    %343 = arith.addi %c0_i32_182, %342 : i32
    %344 = arith.index_cast %343 : i32 to index
    %c0_183 = arith.constant 0 : index
    %345 = vector.load %arg2[%344, %c0_183] : memref<32x128xf32, #tpu.memory_space<vmem>>, vector<1x128xf32>
    %c7_184 = arith.constant 7 : index
    %c0_185 = arith.constant 0 : index
    %346 = vector.load %arg4[%c7_184, %c0_185] : memref<8x128xf32, #tpu.memory_space<vmem>>, vector<1x128xf32>
    tpu.vector_store %arg4[%c7_184, %c0_185], %345 {strides = array<i32>} : memref<8x128xf32, #tpu.memory_space<vmem>>, vector<1x128xf32>,
    %c0_186 = arith.constant 0 : index
    %c0_187 = arith.constant 0 : index
    %347 = vector.load %arg4[%c0_186, %c0_187] : memref<8x128xf32, #tpu.memory_space<vmem>>, vector<8x128xf32>
    %348 = vector.extract_strided_slice %289 {offsets = [0, 0], sizes = [8, 1], strides = [1, 1]} : vector<8x128xf32> to vector<8x1xf32>
    %349 = vector.extract_strided_slice %1 {offsets = [0, 0], sizes = [1, 128], strides = [1, 1]} : vector<6x128xf32> to vector<1x128xf32>
    %350 = vector.broadcast %348 : vector<8x1xf32> to vector<8x128xf32>
    %351 = vector.broadcast %349 : vector<1x128xf32> to vector<8x128xf32>
    %352 = arith.mulf %350, %351 : vector<8x128xf32>
    %353 = arith.addf %347, %352 : vector<8x128xf32>
    %354 = vector.extract_strided_slice %289 {offsets = [0, 1], sizes = [8, 1], strides = [1, 1]} : vector<8x128xf32> to vector<8x1xf32>
    %355 = vector.extract_strided_slice %1 {offsets = [1, 0], sizes = [1, 128], strides = [1, 1]} : vector<6x128xf32> to vector<1x128xf32>
    %356 = vector.broadcast %354 : vector<8x1xf32> to vector<8x128xf32>
    %357 = vector.broadcast %355 : vector<1x128xf32> to vector<8x128xf32>
    %358 = arith.mulf %356, %357 : vector<8x128xf32>
    %359 = arith.addf %353, %358 : vector<8x128xf32>
    %360 = vector.extract_strided_slice %289 {offsets = [0, 2], sizes = [8, 1], strides = [1, 1]} : vector<8x128xf32> to vector<8x1xf32>
    %361 = vector.extract_strided_slice %1 {offsets = [2, 0], sizes = [1, 128], strides = [1, 1]} : vector<6x128xf32> to vector<1x128xf32>
    %362 = vector.broadcast %360 : vector<8x1xf32> to vector<8x128xf32>
    %363 = vector.broadcast %361 : vector<1x128xf32> to vector<8x128xf32>
    %364 = arith.mulf %362, %363 : vector<8x128xf32>
    %365 = arith.addf %359, %364 : vector<8x128xf32>
    %366 = vector.extract_strided_slice %289 {offsets = [0, 3], sizes = [8, 1], strides = [1, 1]} : vector<8x128xf32> to vector<8x1xf32>
    %367 = vector.extract_strided_slice %1 {offsets = [3, 0], sizes = [1, 128], strides = [1, 1]} : vector<6x128xf32> to vector<1x128xf32>
    %368 = vector.broadcast %366 : vector<8x1xf32> to vector<8x128xf32>
    %369 = vector.broadcast %367 : vector<1x128xf32> to vector<8x128xf32>
    %370 = arith.mulf %368, %369 : vector<8x128xf32>
    %371 = arith.addf %365, %370 : vector<8x128xf32>
    %372 = vector.extract_strided_slice %289 {offsets = [0, 4], sizes = [8, 1], strides = [1, 1]} : vector<8x128xf32> to vector<8x1xf32>
    %373 = vector.extract_strided_slice %1 {offsets = [4, 0], sizes = [1, 128], strides = [1, 1]} : vector<6x128xf32> to vector<1x128xf32>
    %374 = vector.broadcast %372 : vector<8x1xf32> to vector<8x128xf32>
    %375 = vector.broadcast %373 : vector<1x128xf32> to vector<8x128xf32>
    %376 = arith.mulf %374, %375 : vector<8x128xf32>
    %377 = arith.addf %371, %376 : vector<8x128xf32>
    %378 = vector.extract_strided_slice %289 {offsets = [0, 5], sizes = [8, 1], strides = [1, 1]} : vector<8x128xf32> to vector<8x1xf32>
    %379 = vector.extract_strided_slice %1 {offsets = [5, 0], sizes = [1, 128], strides = [1, 1]} : vector<6x128xf32> to vector<1x128xf32>
    %380 = vector.broadcast %378 : vector<8x1xf32> to vector<8x128xf32>
    %381 = vector.broadcast %379 : vector<1x128xf32> to vector<8x128xf32>
    %382 = arith.mulf %380, %381 : vector<8x128xf32>
    %383 = arith.addf %377, %382 : vector<8x128xf32>
    %384 = math.tanh %383 : vector<8x128xf32>
    %385 = arith.addf %290, %384 : vector<8x128xf32>
    %cst_188 = arith.constant 2.500000e-01 : f32
    %386 = vector.broadcast %cst_188 : f32 to vector<8x128xf32>
    %387 = arith.mulf %385, %386 : vector<8x128xf32>
    %388 = vector.shape_cast %3 : vector<1x128xf32> to vector<1x128xf32>
    %389 = vector.broadcast %388 : vector<1x128xf32> to vector<8x128xf32>
    %390 = vector.extract_strided_slice %387 {offsets = [0, 0], sizes = [8, 1], strides = [1, 1]} : vector<8x128xf32> to vector<8x1xf32>
    %391 = vector.extract_strided_slice %2 {offsets = [0, 0], sizes = [1, 128], strides = [1, 1]} : vector<6x128xf32> to vector<1x128xf32>
    %392 = vector.broadcast %390 : vector<8x1xf32> to vector<8x128xf32>
    %393 = vector.broadcast %391 : vector<1x128xf32> to vector<8x128xf32>
    %394 = arith.mulf %392, %393 : vector<8x128xf32>
    %395 = arith.addf %389, %394 : vector<8x128xf32>
    %396 = vector.extract_strided_slice %387 {offsets = [0, 1], sizes = [8, 1], strides = [1, 1]} : vector<8x128xf32> to vector<8x1xf32>
    %397 = vector.extract_strided_slice %2 {offsets = [1, 0], sizes = [1, 128], strides = [1, 1]} : vector<6x128xf32> to vector<1x128xf32>
    %398 = vector.broadcast %396 : vector<8x1xf32> to vector<8x128xf32>
    %399 = vector.broadcast %397 : vector<1x128xf32> to vector<8x128xf32>
    %400 = arith.mulf %398, %399 : vector<8x128xf32>
    %401 = arith.addf %395, %400 : vector<8x128xf32>
    %402 = vector.extract_strided_slice %387 {offsets = [0, 2], sizes = [8, 1], strides = [1, 1]} : vector<8x128xf32> to vector<8x1xf32>
    %403 = vector.extract_strided_slice %2 {offsets = [2, 0], sizes = [1, 128], strides = [1, 1]} : vector<6x128xf32> to vector<1x128xf32>
    %404 = vector.broadcast %402 : vector<8x1xf32> to vector<8x128xf32>
    %405 = vector.broadcast %403 : vector<1x128xf32> to vector<8x128xf32>
    %406 = arith.mulf %404, %405 : vector<8x128xf32>
    %407 = arith.addf %401, %406 : vector<8x128xf32>
    %408 = vector.extract_strided_slice %387 {offsets = [0, 3], sizes = [8, 1], strides = [1, 1]} : vector<8x128xf32> to vector<8x1xf32>
    %409 = vector.extract_strided_slice %2 {offsets = [3, 0], sizes = [1, 128], strides = [1, 1]} : vector<6x128xf32> to vector<1x128xf32>
    %410 = vector.broadcast %408 : vector<8x1xf32> to vector<8x128xf32>
    %411 = vector.broadcast %409 : vector<1x128xf32> to vector<8x128xf32>
    %412 = arith.mulf %410, %411 : vector<8x128xf32>
    %413 = arith.addf %407, %412 : vector<8x128xf32>
    %414 = vector.extract_strided_slice %387 {offsets = [0, 4], sizes = [8, 1], strides = [1, 1]} : vector<8x128xf32> to vector<8x1xf32>
    %415 = vector.extract_strided_slice %2 {offsets = [4, 0], sizes = [1, 128], strides = [1, 1]} : vector<6x128xf32> to vector<1x128xf32>
    %416 = vector.broadcast %414 : vector<8x1xf32> to vector<8x128xf32>
    %417 = vector.broadcast %415 : vector<1x128xf32> to vector<8x128xf32>
    %418 = arith.mulf %416, %417 : vector<8x128xf32>
    %419 = arith.addf %413, %418 : vector<8x128xf32>
    %420 = vector.extract_strided_slice %387 {offsets = [0, 5], sizes = [8, 1], strides = [1, 1]} : vector<8x128xf32> to vector<8x1xf32>
    %421 = vector.extract_strided_slice %2 {offsets = [5, 0], sizes = [1, 128], strides = [1, 1]} : vector<6x128xf32> to vector<1x128xf32>
    %422 = vector.broadcast %420 : vector<8x1xf32> to vector<8x128xf32>
    %423 = vector.broadcast %421 : vector<1x128xf32> to vector<8x128xf32>
    %424 = arith.mulf %422, %423 : vector<8x128xf32>
    %425 = arith.addf %419, %424 : vector<8x128xf32>
    %c0_189 = arith.constant 0 : index
    %c0_190 = arith.constant 0 : index
    %426 = vector.load %arg3[%c0_189, %c0_190] : memref<8x128xf32, #tpu.memory_space<vmem>>, vector<8x128xf32>
    tpu.vector_store %arg3[%c0_189, %c0_190], %425 {strides = array<i32>} : memref<8x128xf32, #tpu.memory_space<vmem>>, vector<8x128xf32>,
    return
  }
  func.func @transform_0(%arg0: i32, %arg1: memref<8x4xi32, #tpu.memory_space<smem>>) -> (i32, i32) {
    %c0_i32 = arith.constant 0 : i32
    %c0_i32_0 = arith.constant 0 : i32
    %c0_i32_1 = arith.constant 0 : i32
    return %c0_i32, %c0_i32_0 : i32, i32
  }
  func.func @transform_1(%arg0: i32, %arg1: memref<8x4xi32, #tpu.memory_space<smem>>) -> (i32, i32) {
    %c0_i32 = arith.constant 0 : i32
    %c0_i32_0 = arith.constant 0 : i32
    return %arg0, %c0_i32 : i32, i32
  }
}

</mosaic_0001>

<llo_original>
// kernel: tpu_custom_call.1
$region0: #{tpu_custom_call.1}
  #allocation0 [shape = 'u32[]', space=smem, size = 0x4, offset = 0x4, fixed_abs, tag = 'smem constant byte address 0x4 - core index']
  #allocation1 [shape = 'u32[144,128]{1,0:T(1,128)}', space=vmem, size = 0x12000, scoped, tag = 'internal scratch']
  #allocation2 [shape = 'f32[8,128]{1,0:T(8,128)}', space=vmem, size = 0x1000, scoped, tag = 'scratch operand']
  #allocation3 [shape = 's32[1]{0}', space=sflag, size = 0x4, scoped, tag = 'scoped memory for tpu_custom_call.1']
  #allocation4 [shape = 'u8[4096]{0}', space=smem, size = 0x1000, scoped, tag = 'prefetched SMEM operand 0']
  %s0 = inlined_call_operand.vmem [shape: s32[8,4], index: 0, kind: input, shape index: {}]
  %s1 = inlined_call_operand.hbm [shape: f32[32,128], index: 1, kind: input, shape index: {}]
  %s2 = inlined_call_operand.hbm [shape: f32[8,128], index: 2, kind: output, shape index: {}]
  %s3 = sld [smem:[#allocation0]]
  $region18: #{tpu_custom_call.1} parent=0
    _
  %s5 = ssub.s32 1, %s3
  %s6 = scalar_select 0, %s5, %s3
  %s7 = sshll.u32 %s0, 4
  %s8 = int_to_ptr.vmem [resolvable:$true] %s7
  %10 = dma.vmem_to_smem %s8, 128, [#allocation4], [#allocation3]
  %11 = dma.done [#allocation3], 128
  %12 = sfence
  $region1: #{tpu_custom_call.1} parent=0
    #allocation5 [shape = 'u8[16384]{0}', space=vmem, size = 0x4000, scoped, tag = 'input window, operand 1, single buffered']
    #allocation6 [shape = 's32[1]{0}', space=sflag, size = 0x4, scoped, tag = 'scoped memory for tpu_custom_call.1']
    #allocation7 [shape = 's32[1]{0}', space=sflag, size = 0x4, scoped, tag = 'scoped memory for tpu_custom_call.1']
    #allocation8 [shape = 'u8[4096]{0}', space=vmem, size = 0x1000, scoped, tag = 'output window, operand 0, single buffered']
    %13 = vsyncpa [#allocation6], 0
    %14 = vsyncpa [#allocation7], 0
    // Predicated region
    $region2: #{tpu_custom_call.1} parent=1 // pred_check
      _
    $region3: #{tpu_custom_call.1} parent=1 // pred_check_branch
      %16 = sbr.rel (0) target = $region5
    $region4: #{tpu_custom_call.1} parent=1 // pred_region
      %s18 = ssub.s32 512, 512
      %19 = vsyncadd [#allocation6], %s18
      %s20 = sshll.u32 [#allocation5], 4
      %s21 = int_to_ptr.vmem [resolvable:$true] %s20
      %26 = dma.hbm_to_vmem [thread:$0]  %s1, 512, %s21, [#allocation6], 128, 128, 8
    $region5: #{tpu_custom_call.1} parent=1 // pred_fallthru
      _
    // Predicated region
    $region6: #{tpu_custom_call.1} parent=1 // pred_check
      _
    $region7: #{tpu_custom_call.1} parent=1 // pred_check_branch
      %28 = sbr.rel (0) target = $region9
    $region8: #{tpu_custom_call.1} parent=1 // pred_region
      %29 = dma.done [#allocation6], 512
    $region9: #{tpu_custom_call.1} parent=1 // pred_fallthru
      _
    %s30 = smul.u32 0, 8
    %v31 = vld [vmem:[#allocation5 + $0x10] sm:$0x3f]
    %v32 = vld [vmem:[#allocation5 + $0x18] sm:$0x3f]
    %v33 = vld [vmem:[#allocation5 + $0x1e] sm:$0x1]
    %s34 = smul.u32 %s30, 128
    %s35 = sld [smem:[#allocation4 + %s34]]
    %s36 = scalar_lea.vmem [#allocation5], %s35
    %v37 = vld [vmem:[%s36] sm:$0x1]
    %38 = vst [vmem:[#allocation2] sm:$0x1] %v37
    %s39 = sadd.s32 %s30, 1
    %s40 = smul.u32 %s39, 128
    %s41 = sld [smem:[#allocation4 + %s40]]
    %s42 = scalar_lea.vmem [#allocation5], %s41
    %v43 = vld [vmem:[%s42] sm:$0x1]
    %44 = vst [vmem:[#allocation2 + $0x1] sm:$0x1] %v43
    %s45 = sadd.s32 %s30, 2
    %s46 = smul.u32 %s45, 128
    %s47 = sld [smem:[#allocation4 + %s46]]
    %s48 = scalar_lea.vmem [#allocation5], %s47
    %v49 = vld [vmem:[%s48] sm:$0x1]
    %50 = vst [vmem:[#allocation2 + $0x2] sm:$0x1] %v49
    %s51 = sadd.s32 %s30, 3
    %s52 = smul.u32 %s51, 128
    %s53 = sld [smem:[#allocation4 + %s52]]
    %s54 = scalar_lea.vmem [#allocation5], %s53
    %v55 = vld [vmem:[%s54] sm:$0x1]
    %56 = vst [vmem:[#allocation2 + $0x3] sm:$0x1] %v55
    %s57 = sadd.s32 %s30, 4
    %s58 = smul.u32 %s57, 128
    %s59 = sld [smem:[#allocation4 + %s58]]
    %s60 = scalar_lea.vmem [#allocation5], %s59
    %v61 = vld [vmem:[%s60] sm:$0x1]
    %62 = vst [vmem:[#allocation2 + $0x4] sm:$0x1] %v61
    %s63 = sadd.s32 %s30, 5
    %s64 = smul.u32 %s63, 128
    %s65 = sld [smem:[#allocation4 + %s64]]
    %s66 = scalar_lea.vmem [#allocation5], %s65
    %v67 = vld [vmem:[%s66] sm:$0x1]
    %68 = vst [vmem:[#allocation2 + $0x5] sm:$0x1] %v67
    %s69 = sadd.s32 %s30, 6
    %s70 = smul.u32 %s69, 128
    %s71 = sld [smem:[#allocation4 + %s70]]
    %s72 = scalar_lea.vmem [#allocation5], %s71
    %v73 = vld [vmem:[%s72] sm:$0x1]
    %74 = vst [vmem:[#allocation2 + $0x6] sm:$0x1] %v73
    %s75 = sadd.s32 %s30, 7
    %s76 = smul.u32 %s75, 128
    %s77 = sld [smem:[#allocation4 + %s76]]
    %s78 = scalar_lea.vmem [#allocation5], %s77
    %v79 = vld [vmem:[%s78] sm:$0x1]
    %80 = vst [vmem:[#allocation2 + $0x7] sm:$0x1] %v79
    %v81 = vld [vmem:[#allocation2] sm:$0xff]
    %v82 = vlaneseq
    %v83 = vshrl.u32 %v82, 7
    %v84 = vsub.s32 0, %v83
    %v85 = vrot.slane %v31, %v84
    %v86 = vmul.f32 %v85, 0.0
    %v87 = vadd.f32 %v81, %v86
    %v88 = vlaneseq
    %v89 = vshrl.u32 %v88, 7
    %v90 = vsub.s32 1, %v89
    %v91 = vrot.slane %v31, %v90
    %v92 = vmul.f32 %v91, 0.0
    %v93 = vadd.f32 %v87, %v92
    %v94 = vlaneseq
    %v95 = vshrl.u32 %v94, 7
    %v96 = vsub.s32 2, %v95
    %v97 = vrot.slane %v31, %v96
    %v98 = vmul.f32 %v97, 0.0
    %v99 = vadd.f32 %v93, %v98
    %v100 = vlaneseq
    %v101 = vshrl.u32 %v100, 7
    %v102 = vsub.s32 3, %v101
    %v103 = vrot.slane %v31, %v102
    %v104 = vmul.f32 %v103, 0.0
    %v105 = vadd.f32 %v99, %v104
    %v106 = vlaneseq
    %v107 = vshrl.u32 %v106, 7
    %v108 = vsub.s32 4, %v107
    %v109 = vrot.slane %v31, %v108
    %v110 = vmul.f32 %v109, 0.0
    %v111 = vadd.f32 %v105, %v110
    %v112 = vlaneseq
    %v113 = vshrl.u32 %v112, 7
    %v114 = vsub.s32 5, %v113
    %v115 = vrot.slane %v31, %v114
    %v116 = vmul.f32 %v115, 0.0
    %v117 = vadd.f32 %v111, %v116
    %v118 = vtanh.pop %v117
    %v119 = vadd.f32 %v118, 0.0
    %s120 = sadd.s32 %s34, 1
    %s121 = sld [smem:[#allocation4 + %s120]]
    %s122 = scalar_lea.vmem [#allocation5], %s121
    %v123 = vld [vmem:[%s122] sm:$0x1]
    %124 = vst [vmem:[#allocation2] sm:$0x1] %v123
    %s125 = sadd.s32 %s40, 1
    %s126 = sld [smem:[#allocation4 + %s125]]
    %s127 = scalar_lea.vmem [#allocation5], %s126
    %v128 = vld [vmem:[%s127] sm:$0x1]
    %129 = vst [vmem:[#allocation2 + $0x1] sm:$0x1] %v128
    %s130 = sadd.s32 %s46, 1
    %s131 = sld [smem:[#allocation4 + %s130]]
    %s132 = scalar_lea.vmem [#allocation5], %s131
    %v133 = vld [vmem:[%s132] sm:$0x1]
    %134 = vst [vmem:[#allocation2 + $0x2] sm:$0x1] %v133
    %s135 = sadd.s32 %s52, 1
    %s136 = sld [smem:[#allocation4 + %s135]]
    %s137 = scalar_lea.vmem [#allocation5], %s136
    %v138 = vld [vmem:[%s137] sm:$0x1]
    %139 = vst [vmem:[#allocation2 + $0x3] sm:$0x1] %v138
    %s140 = sadd.s32 %s58, 1
    %s141 = sld [smem:[#allocation4 + %s140]]
    %s142 = scalar_lea.vmem [#allocation5], %s141
    %v143 = vld [vmem:[%s142] sm:$0x1]
    %144 = vst [vmem:[#allocation2 + $0x4] sm:$0x1] %v143
    %s145 = sadd.s32 %s64, 1
    %s146 = sld [smem:[#allocation4 + %s145]]
    %s147 = scalar_lea.vmem [#allocation5], %s146
    %v148 = vld [vmem:[%s147] sm:$0x1]
    %149 = vst [vmem:[#allocation2 + $0x5] sm:$0x1] %v148
    %s150 = sadd.s32 %s70, 1
    %s151 = sld [smem:[#allocation4 + %s150]]
    %s152 = scalar_lea.vmem [#allocation5], %s151
    %v153 = vld [vmem:[%s152] sm:$0x1]
    %154 = vst [vmem:[#allocation2 + $0x6] sm:$0x1] %v153
    %s155 = sadd.s32 %s76, 1
    %s156 = sld [smem:[#allocation4 + %s155]]
    %s157 = scalar_lea.vmem [#allocation5], %s156
    %v158 = vld [vmem:[%s157] sm:$0x1]
    %159 = vst [vmem:[#allocation2 + $0x7] sm:$0x1] %v158
    %v160 = vld [vmem:[#allocation2] sm:$0xff]
    %162 = vset.pattern.permute.xlu0 0
    %163 = vperm.xlu0 %162, %v118
    %v164 = vpop.permute.xlu0 %163
    %v166 = vmul.f32 %v164, %v85
    %v167 = vadd.f32 %v160, %v166
    %168 = vset.pattern.permute.xlu0 1
    %169 = vperm.xlu0 %168, %v118
    %v170 = vpop.permute.xlu0 %169
    %v172 = vmul.f32 %v170, %v91
    %v173 = vadd.f32 %v167, %v172
    %174 = vset.pattern.permute.xlu0 2
    %175 = vperm.xlu0 %174, %v118
    %v176 = vpop.permute.xlu0 %175
    %v178 = vmul.f32 %v176, %v97
    %v179 = vadd.f32 %v173, %v178
    %180 = vset.pattern.permute.xlu0 3
    %181 = vperm.xlu0 %180, %v118
    %v182 = vpop.permute.xlu0 %181
    %v184 = vmul.f32 %v182, %v103
    %v185 = vadd.f32 %v179, %v184
    %186 = vset.pattern.permute.xlu0 4
    %187 = vperm.xlu0 %186, %v118
    %v188 = vpop.permute.xlu0 %187
    %v190 = vmul.f32 %v188, %v109
    %v191 = vadd.f32 %v185, %v190
    %192 = vset.pattern.permute.xlu0 5
    %193 = vperm.xlu0 %192, %v118
    %v194 = vpop.permute.xlu0 %193
    %v196 = vmul.f32 %v194, %v115
    %v197 = vadd.f32 %v191, %v196
    %v198 = vtanh.pop %v197
    %v199 = vadd.f32 %v119, %v198
    %s200 = sadd.s32 %s34, 2
    %s201 = sld [smem:[#allocation4 + %s200]]
    %s202 = scalar_lea.vmem [#allocation5], %s201
    %v203 = vld [vmem:[%s202] sm:$0x1]
    %204 = vst [vmem:[#allocation2] sm:$0x1] %v203
    %s205 = sadd.s32 %s40, 2
    %s206 = sld [smem:[#allocation4 + %s205]]
    %s207 = scalar_lea.vmem [#allocation5], %s206
    %v208 = vld [vmem:[%s207] sm:$0x1]
    %209 = vst [vmem:[#allocation2 + $0x1] sm:$0x1] %v208
    %s210 = sadd.s32 %s46, 2
    %s211 = sld [smem:[#allocation4 + %s210]]
    %s212 = scalar_lea.vmem [#allocation5], %s211
    %v213 = vld [vmem:[%s212] sm:$0x1]
    %214 = vst [vmem:[#allocation2 + $0x2] sm:$0x1] %v213
    %s215 = sadd.s32 %s52, 2
    %s216 = sld [smem:[#allocation4 + %s215]]
    %s217 = scalar_lea.vmem [#allocation5], %s216
    %v218 = vld [vmem:[%s217] sm:$0x1]
    %219 = vst [vmem:[#allocation2 + $0x3] sm:$0x1] %v218
    %s220 = sadd.s32 %s58, 2
    %s221 = sld [smem:[#allocation4 + %s220]]
    %s222 = scalar_lea.vmem [#allocation5], %s221
    %v223 = vld [vmem:[%s222] sm:$0x1]
    %224 = vst [vmem:[#allocation2 + $0x4] sm:$0x1] %v223
    %s225 = sadd.s32 %s64, 2
    %s226 = sld [smem:[#allocation4 + %s225]]
    %s227 = scalar_lea.vmem [#allocation5], %s226
    %v228 = vld [vmem:[%s227] sm:$0x1]
    %229 = vst [vmem:[#allocation2 + $0x5] sm:$0x1] %v228
    %s230 = sadd.s32 %s70, 2
    %s231 = sld [smem:[#allocation4 + %s230]]
    %s232 = scalar_lea.vmem [#allocation5], %s231
    %v233 = vld [vmem:[%s232] sm:$0x1]
    %234 = vst [vmem:[#allocation2 + $0x6] sm:$0x1] %v233
    %s235 = sadd.s32 %s76, 2
    %s236 = sld [smem:[#allocation4 + %s235]]
    %s237 = scalar_lea.vmem [#allocation5], %s236
    %v238 = vld [vmem:[%s237] sm:$0x1]
    %239 = vst [vmem:[#allocation2 + $0x7] sm:$0x1] %v238
    %v240 = vld [vmem:[#allocation2] sm:$0xff]
    %242 = vset.pattern.permute.xlu0 0
    %243 = vperm.xlu0 %242, %v198
    %v244 = vpop.permute.xlu0 %243
    %v246 = vmul.f32 %v244, %v85
    %v247 = vadd.f32 %v240, %v246
    %248 = vset.pattern.permute.xlu0 1
    %249 = vperm.xlu0 %248, %v198
    %v250 = vpop.permute.xlu0 %249
    %v252 = vmul.f32 %v250, %v91
    %v253 = vadd.f32 %v247, %v252
    %254 = vset.pattern.permute.xlu0 2
    %255 = vperm.xlu0 %254, %v198
    %v256 = vpop.permute.xlu0 %255
    %v258 = vmul.f32 %v256, %v97
    %v259 = vadd.f32 %v253, %v258
    %260 = vset.pattern.permute.xlu0 3
    %261 = vperm.xlu0 %260, %v198
    %v262 = vpop.permute.xlu0 %261
    %v264 = vmul.f32 %v262, %v103
    %v265 = vadd.f32 %v259, %v264
    %266 = vset.pattern.permute.xlu0 4
    %267 = vperm.xlu0 %266, %v198
    %v268 = vpop.permute.xlu0 %267
    %v270 = vmul.f32 %v268, %v109
    %v271 = vadd.f32 %v265, %v270
    %272 = vset.pattern.permute.xlu0 5
    %273 = vperm.xlu0 %272, %v198
    %v274 = vpop.permute.xlu0 %273
    %v276 = vmul.f32 %v274, %v115
    %v277 = vadd.f32 %v271, %v276
    %v278 = vtanh.pop %v277
    %v279 = vadd.f32 %v199, %v278
    %s280 = sadd.s32 %s34, 3
    %s281 = sld [smem:[#allocation4 + %s280]]
    %s282 = scalar_lea.vmem [#allocation5], %s281
    %v283 = vld [vmem:[%s282] sm:$0x1]
    %284 = vst [vmem:[#allocation2] sm:$0x1] %v283
    %s285 = sadd.s32 %s40, 3
    %s286 = sld [smem:[#allocation4 + %s285]]
    %s287 = scalar_lea.vmem [#allocation5], %s286
    %v288 = vld [vmem:[%s287] sm:$0x1]
    %289 = vst [vmem:[#allocation2 + $0x1] sm:$0x1] %v288
    %s290 = sadd.s32 %s46, 3
    %s291 = sld [smem:[#allocation4 + %s290]]
    %s292 = scalar_lea.vmem [#allocation5], %s291
    %v293 = vld [vmem:[%s292] sm:$0x1]
    %294 = vst [vmem:[#allocation2 + $0x2] sm:$0x1] %v293
    %s295 = sadd.s32 %s52, 3
    %s296 = sld [smem:[#allocation4 + %s295]]
    %s297 = scalar_lea.vmem [#allocation5], %s296
    %v298 = vld [vmem:[%s297] sm:$0x1]
    %299 = vst [vmem:[#allocation2 + $0x3] sm:$0x1] %v298
    %s300 = sadd.s32 %s58, 3
    %s301 = sld [smem:[#allocation4 + %s300]]
    %s302 = scalar_lea.vmem [#allocation5], %s301
    %v303 = vld [vmem:[%s302] sm:$0x1]
    %304 = vst [vmem:[#allocation2 + $0x4] sm:$0x1] %v303
    %s305 = sadd.s32 %s64, 3
    %s306 = sld [smem:[#allocation4 + %s305]]
    %s307 = scalar_lea.vmem [#allocation5], %s306
    %v308 = vld [vmem:[%s307] sm:$0x1]
    %309 = vst [vmem:[#allocation2 + $0x5] sm:$0x1] %v308
    %s310 = sadd.s32 %s70, 3
    %s311 = sld [smem:[#allocation4 + %s310]]
    %s312 = scalar_lea.vmem [#allocation5], %s311
    %v313 = vld [vmem:[%s312] sm:$0x1]
    %314 = vst [vmem:[#allocation2 + $0x6] sm:$0x1] %v313
    %s315 = sadd.s32 %s76, 3
    %s316 = sld [smem:[#allocation4 + %s315]]
    %s317 = scalar_lea.vmem [#allocation5], %s316
    %v318 = vld [vmem:[%s317] sm:$0x1]
    %319 = vst [vmem:[#allocation2 + $0x7] sm:$0x1] %v318
    %v320 = vld [vmem:[#allocation2] sm:$0xff]
    %322 = vset.pattern.permute.xlu0 0
    %323 = vperm.xlu0 %322, %v278
    %v324 = vpop.permute.xlu0 %323
    %v326 = vmul.f32 %v324, %v85
    %v327 = vadd.f32 %v320, %v326
    %328 = vset.pattern.permute.xlu0 1
    %329 = vperm.xlu0 %328, %v278
    %v330 = vpop.permute.xlu0 %329
    %v332 = vmul.f32 %v330, %v91
    %v333 = vadd.f32 %v327, %v332
    %334 = vset.pattern.permute.xlu0 2
    %335 = vperm.xlu0 %334, %v278
    %v336 = vpop.permute.xlu0 %335
    %v338 = vmul.f32 %v336, %v97
    %v339 = vadd.f32 %v333, %v338
    %340 = vset.pattern.permute.xlu0 3
    %341 = vperm.xlu0 %340, %v278
    %v342 = vpop.permute.xlu0 %341
    %v344 = vmul.f32 %v342, %v103
    %v345 = vadd.f32 %v339, %v344
    %346 = vset.pattern.permute.xlu0 4
    %347 = vperm.xlu0 %346, %v278
    %v348 = vpop.permute.xlu0 %347
    %v350 = vmul.f32 %v348, %v109
    %v351 = vadd.f32 %v345, %v350
    %352 = vset.pattern.permute.xlu0 5
    %353 = vperm.xlu0 %352, %v278
    %v354 = vpop.permute.xlu0 %353
    %v356 = vmul.f32 %v354, %v115
    %v357 = vadd.f32 %v351, %v356
    %v358 = vtanh.pop %v357
    %v359 = vadd.f32 %v279, %v358
    %v360 = vmul.f32 %v359, 0.25
    %v361 = vlaneseq
    %v362 = vshrl.u32 %v361, 7
    %v363 = vsub.s32 0, %v362
    %v364 = vrot.slane %v33, %v363
    %366 = vset.pattern.permute.xlu0 0
    %367 = vperm.xlu0 %366, %v360
    %v368 = vpop.permute.xlu0 %367
    %v370 = vlaneseq
    %v371 = vshrl.u32 %v370, 7
    %v372 = vsub.s32 0, %v371
    %v373 = vrot.slane %v32, %v372
    %v374 = vmul.f32 %v368, %v373
    %v375 = vadd.f32 %v364, %v374
    %376 = vset.pattern.permute.xlu0 1
    %377 = vperm.xlu0 %376, %v360
    %v378 = vpop.permute.xlu0 %377
    %v380 = vlaneseq
    %v381 = vshrl.u32 %v380, 7
    %v382 = vsub.s32 1, %v381
    %v383 = vrot.slane %v32, %v382
    %v384 = vmul.f32 %v378, %v383
    %v385 = vadd.f32 %v375, %v384
    %386 = vset.pattern.permute.xlu0 2
    %387 = vperm.xlu0 %386, %v360
    %v388 = vpop.permute.xlu0 %387
    %v390 = vlaneseq
    %v391 = vshrl.u32 %v390, 7
    %v392 = vsub.s32 2, %v391
    %v393 = vrot.slane %v32, %v392
    %v394 = vmul.f32 %v388, %v393
    %v395 = vadd.f32 %v385, %v394
    %396 = vset.pattern.permute.xlu0 3
    %397 = vperm.xlu0 %396, %v360
    %v398 = vpop.permute.xlu0 %397
    %v400 = vlaneseq
    %v401 = vshrl.u32 %v400, 7
    %v402 = vsub.s32 3, %v401
    %v403 = vrot.slane %v32, %v402
    %v404 = vmul.f32 %v398, %v403
    %v405 = vadd.f32 %v395, %v404
    %406 = vset.pattern.permute.xlu0 4
    %407 = vperm.xlu0 %406, %v360
    %v408 = vpop.permute.xlu0 %407
    %v410 = vlaneseq
    %v411 = vshrl.u32 %v410, 7
    %v412 = vsub.s32 4, %v411
    %v413 = vrot.slane %v32, %v412
    %v414 = vmul.f32 %v408, %v413
    %v415 = vadd.f32 %v405, %v414
    %416 = vset.pattern.permute.xlu0 5
    %417 = vperm.xlu0 %416, %v360
    %v418 = vpop.permute.xlu0 %417
    %v420 = vlaneseq
    %v421 = vshrl.u32 %v420, 7
    %v422 = vsub.s32 5, %v421
    %v423 = vrot.slane %v32, %v422
    %v424 = vmul.f32 %v418, %v423
    %v425 = vadd.f32 %v415, %v424
    %426 = vst [vmem:[#allocation8] sm:$0xff] %v425
    // Predicated region
    $region10: #{tpu_custom_call.1} parent=1 // pred_check
      _
    $region11: #{tpu_custom_call.1} parent=1 // pred_check_branch
      %428 = sbr.rel (0) target = $region13
    $region12: #{tpu_custom_call.1} parent=1 // pred_region
      %s430 = ssub.s32 128, 128
      %431 = vsyncadd [#allocation7], %s430
      %s433 = sshll.u32 [#allocation8], 4
      %s434 = int_to_ptr.vmem [resolvable:$true] %s433
      %436 = dma.vmem_to_hbm [thread:$0]  %s434, 128, %s2, [#allocation7]
    $region13: #{tpu_custom_call.1} parent=1 // pred_fallthru
      _
    // Predicated region
    $region14: #{tpu_custom_call.1} parent=1 // pred_check
      _
    $region15: #{tpu_custom_call.1} parent=1 // pred_check_branch
      %438 = sbr.rel (0) target = $region17
    $region16: #{tpu_custom_call.1} parent=1 // pred_region
      %439 = dma.done [#allocation7], 128
    $region17: #{tpu_custom_call.1} parent=1 // pred_fallthru
      _
    %440 = vsyncpa [#allocation6], 1
    %441 = vsyncpa [#allocation7], 1

</llo_original>
